<compile_context>
chip_gen: v7x
topology: tpu7x:2x2x1
jax: 0.10.0
libtpu: 0.0.40
codegen_flags: <defaults>
</compile_context>

<pallas_src>
import jax
import jax.numpy as jnp
import numpy as np
from jax.experimental import pallas as pl
from jax.experimental.pallas import tpu as pltpu

_MIB = 1024 * 1024


# ----------------------------------------------------------------------------
# Kernels
# ----------------------------------------------------------------------------
def _activation(x, a0, a1, a2, a3, a4):
    """myactivefunc: a0*tanh(x)*sin(a1*x + a2) + a3*x + a4 (f32 in-register)."""
    return a0 * jnp.tanh(x) * jnp.sin(a1 * x + a2) + a3 * x + a4


def node_kernel(w_ref, p_ref, src_ref, out_ref):
    """Single node.
       w_ref:   (L,) f32 SMEM          link weights
       p_ref:   (7,) f32 SMEM          node params (p[0]=bias, p[1:]=a[0:])
       src_ref: (L, TB, TH) VMEM       stacked source-node outputs (tile)
       out_ref: (TB, TH) VMEM          output tile
    """
    L = src_ref.shape[0]

    # Hoist scalar reads (SMEM) into locals; broadcasts happen once per tile.
    bias = p_ref[0]
    a0, a1, a2, a3, a4 = p_ref[1], p_ref[2], p_ref[3], p_ref[4], p_ref[5]
    # p_ref[6] (a[5]) is unused, matching the PyTorch module.

    # Weighted sum over incoming links, bias folded into the first term.
    # L is tiny & static -> fully unrolled VPU multiply-adds (no MXU).
    x = src_ref[0].astype(jnp.float32) * w_ref[0] + bias
    for l in range(1, L):
        x = x + src_ref[l].astype(jnp.float32) * w_ref[l]

    out_ref[...] = _activation(x, a0, a1, a2, a3, a4).astype(out_ref.dtype)


def node_bias_only_kernel(p_ref, out_ref):
    """Node with no inlinks: x = params[0] broadcast over the tile."""
    bias = p_ref[0]
    a0, a1, a2, a3, a4 = p_ref[1], p_ref[2], p_ref[3], p_ref[4], p_ref[5]
    x = jnp.zeros(out_ref.shape, jnp.float32) + bias
    out_ref[...] = _activation(x, a0, a1, a2, a3, a4).astype(out_ref.dtype)


def nodes_kernel(w_ref, p_ref, src_ref, out_ref):
    """Batched nodes (one pallas_call for the whole graph layer).
       w_ref:   (N*L,) f32 SMEM        flat per-node link-weight table
       p_ref:   (N*7,) f32 SMEM        flat per-node param table
       src_ref: (1, L, TB, TH) VMEM    node n's stacked source outputs (tile)
       out_ref: (1, TB, TH) VMEM       node n's output tile
    """
    n = pl.program_id(0)
    L = src_ref.shape[1]

    pbase = n * 7
    bias = p_ref[pbase]
    a0, a1 = p_ref[pbase + 1], p_ref[pbase + 2]
    a2, a3, a4 = p_ref[pbase + 3], p_ref[pbase + 4], p_ref[pbase + 5]

    wbase = n * L
    x = src_ref[0, 0].astype(jnp.float32) * w_ref[wbase] + bias
    for l in range(1, L):
        x = x + src_ref[0, l].astype(jnp.float32) * w_ref[wbase + l]

    out_ref[0] = _activation(x, a0, a1, a2, a3, a4).astype(out_ref.dtype)


# ----------------------------------------------------------------------------
# Tiling / budget helpers
# ----------------------------------------------------------------------------
def _vmem_capacity_bytes():
    """Best-effort physical VMEM query (falls back to v7x-safe 64 MiB)."""
    try:
        info = pltpu.get_tpu_info()
        for attr in ("vmem_capacity_bytes", "vmem_size_bytes", "vmem_bytes"):
            v = getattr(info, attr, None)
            if v:
                return int(v)
    except Exception:
        pass
    return 64 * _MIB


def _vmem_budgets():
    """(double-buffered tile budget, vmem_limit_bytes) per TPU generation."""
    cap = _vmem_capacity_bytes()
    if cap >= 96 * _MIB:            # v5e / v6e: 128 MiB physical VMEM
        return 28 * _MIB, 64 * _MIB
    # v7x: 64 MiB per TensorCore -> keep tiles + scoped limit well below it.
    return 18 * _MIB, 44 * _MIB


def _choose_tiles(L, B, H, *, in_bytes, out_bytes, budget_bytes,
                  want_multiple_steps=True):
    """Jointly size (tb, th).  B, H are already (8, 128)-aligned.

    Maximizes the per-step tile (bigger DMAs, fewer grid steps) subject to the
    double-buffered footprint 2*tb*th*(L*in_bytes + out_bytes) fitting the
    budget; when possible prefers a grid with >= 2 steps so both v7x
    TensorCores get work.  Ties prefer a wider lane dimension.
    """
    per_elem = 2 * (L * in_bytes + out_bytes)     # double-buffered bytes/elem

    th_cands = [d for d in range(128, H + 1, 128) if H % d == 0]
    tb_cands = [d for d in range(8, B + 1, 8) if B % d == 0]

    best = None           # (tile_elems, th, tb)
    best_multi = None     # same, restricted to grids with >= 2 steps
    for th in th_cands:
        for tb in tb_cands:
            if tb * th * per_elem > budget_bytes:
                continue
            key = (tb * th, th, tb)
            if best is None or key > best:
                best = key
            if (B // tb) * (H // th) >= 2 and (best_multi is None
                                               or key > best_multi):
                best_multi = key
    if want_multiple_steps and best_multi is not None:
        best = best_multi
    if best is None:      # even the minimum tile exceeds budget (huge L)
        return 8, 128
    _, th, tb = best
    return tb, th


def _pad_bh(x, axis_b, axis_h):
    """Pad the (B, H) axes up to multiples of (8, 128); return original B, H."""
    B, H = x.shape[axis_b], x.shape[axis_h]
    pb, ph = (-B) % 8, (-H) % 128
    if pb == 0 and ph == 0:
        return x, B, H
    pads = [(0, 0)] * x.ndim
    pads[axis_b] = (0, pb)
    pads[axis_h] = (0, ph)
    return jnp.pad(x, pads), B, H


# ----------------------------------------------------------------------------
# Wrappers
# ----------------------------------------------------------------------------
def _bias_only_forward(params, B, H, *, out_dtype, budget, vmem_limit):
    pb, ph = (-B) % 8, (-H) % 128
    Bp, Hp = B + pb, H + ph
    tb, th = _choose_tiles(0, Bp, Hp, in_bytes=0,
                           out_bytes=jnp.dtype(out_dtype).itemsize,
                           budget_bytes=budget)
    out = pl.pallas_call(
        node_bias_only_kernel,
        out_shape=jax.ShapeDtypeStruct((Bp, Hp), out_dtype),
        grid=(Bp // tb, Hp // th),
        in_specs=[pl.BlockSpec(memory_space=pltpu.MemorySpace.SMEM)],
        out_specs=pl.BlockSpec((tb, th), lambda i, j: (i, j)),
        compiler_params=pltpu.CompilerParams(
            dimension_semantics=("parallel", "parallel"),
            vmem_limit_bytes=vmem_limit,
        ),
    )(params)
    if (B, H) != (Bp, Hp):
        out = out[:B, :H]
    return out


def node_forward(src_outputs, link_weights, params, *, tb=None, th=None,
                 out_dtype=jnp.float32, src_buffers=None):
    """Single Node forward.
       src_outputs: (L, B, H) (f32 or bf16); link_weights: (L,); params: (7,).
    """
    L, B, H = src_outputs.shape
    link_weights = link_weights.astype(jnp.float32)
    params = params.astype(jnp.float32)

    budget, vmem_limit = _vmem_budgets()

    if L == 0:
        # No inlinks: x = params[0] everywhere -> no HBM read needed at all.
        return _bias_only_forward(params, B, H, out_dtype=out_dtype,
                                  budget=budget, vmem_limit=vmem_limit)

    src_outputs, B0, H0 = _pad_bh(src_outputs, 1, 2)
    _, Bp, Hp = src_outputs.shape

    auto_tb, auto_th = _choose_tiles(
        L, Bp, Hp, in_bytes=src_outputs.dtype.itemsize,
        out_bytes=jnp.dtype(out_dtype).itemsize, budget_bytes=budget)
    tb = auto_tb if tb is None else tb
    th = auto_th if th is None else th
    assert Bp % tb == 0 and Hp % th == 0, "tile must divide padded (B, H)"

    src_kwargs = {}
    if src_buffers is not None and src_buffers != 2:
        # Optional deeper pipelining for small, latency-dominated tiles.
        src_kwargs["pipeline_mode"] = pl.Buffered(src_buffers)

    out = pl.pallas_call(
        node_kernel,
        out_shape=jax.ShapeDtypeStruct((Bp, Hp), out_dtype),
        grid=(Bp // tb, Hp // th),
        in_specs=[
            # Scalars stay resident in SMEM across all grid steps.
            pl.BlockSpec(memory_space=pltpu.MemorySpace.SMEM),   # link weights
            pl.BlockSpec(memory_space=pltpu.MemorySpace.SMEM),   # node params
            # Tiled, auto double-buffered HBM->VMEM pipeline over (B, H).
            pl.BlockSpec((L, tb, th), lambda i, j: (0, i, j), **src_kwargs),
        ],
        out_specs=pl.BlockSpec((tb, th), lambda i, j: (i, j)),
        compiler_params=pltpu.CompilerParams(
            dimension_semantics=("parallel", "parallel"),
            vmem_limit_bytes=vmem_limit,
        ),
    )(link_weights, params, src_outputs)

    if (B0, H0) != (Bp, Hp):
        out = out[:B0, :H0]
    return out


def nodes_forward(src_outputs, link_weights, params, *, tb=None, th=None,
                  out_dtype=jnp.float32):
    """Batched evaluation of N independent Nodes in ONE pallas_call.

       src_outputs:  (N, L, B, H)  per-node stacked source outputs
                                   (zero-pad unused links to a common L)
       link_weights: (N, L)        per-node link weights
       params:       (N, 7)        per-node params
       returns:      (N, B, H)
    """
    N, L, B, H = src_outputs.shape
    assert N >= 1 and L >= 1
    w_flat = link_weights.reshape(-1).astype(jnp.float32)   # 1-D SMEM table
    p_flat = params.reshape(-1).astype(jnp.float32)         # 1-D SMEM table

    budget, vmem_limit = _vmem_budgets()
    src_outputs, B0, H0 = _pad_bh(src_outputs, 2, 3)
    _, _, Bp, Hp = src_outputs.shape

    auto_tb, auto_th = _choose_tiles(
        L, Bp, Hp, in_bytes=src_outputs.dtype.itemsize,
        out_bytes=jnp.dtype(out_dtype).itemsize, budget_bytes=budget,
        want_multiple_steps=(N < 2))   # node axis already feeds both TCs
    tb = auto_tb if tb is None else tb
    th = auto_th if th is None else th
    assert Bp % tb == 0 and Hp % th == 0, "tile must divide padded (B, H)"

    out = pl.pallas_call(
        nodes_kernel,
        out_shape=jax.ShapeDtypeStruct((N, Bp, Hp), out_dtype),
        grid=(N, Bp // tb, Hp // th),
        in_specs=[
            pl.BlockSpec(memory_space=pltpu.MemorySpace.SMEM),   # (N*L,) weights
            pl.BlockSpec(memory_space=pltpu.MemorySpace.SMEM),   # (N*7,) params
            pl.BlockSpec((1, L, tb, th), lambda n, i, j: (n, 0, i, j)),
        ],
        out_specs=pl.BlockSpec((1, tb, th), lambda n, i, j: (n, i, j)),
        compiler_params=pltpu.CompilerParams(
            dimension_semantics=("parallel", "parallel", "parallel"),
            vmem_limit_bytes=vmem_limit,
        ),
    )(w_flat, p_flat, src_outputs)

    if (B0, H0) != (Bp, Hp):
        out = out[:, :B0, :H0]
    return out


# ----------------------------------------------------------------------------
# Plain-JAX reference (mirrors the PyTorch forward)
# ----------------------------------------------------------------------------
def node_forward_ref(src_outputs, link_weights, params):
    x = jnp.einsum("lbh,l->bh", src_outputs.astype(jnp.float32),
                   link_weights.astype(jnp.float32)) + params[0]
    a = params[1:]
    return a[0] * jnp.tanh(x) * jnp.sin(a[1] * x + a[2]) + a[3] * x + a[4]


# ----------------------------------------------------------------------------
# Demo / checks
# ----------------------------------------------------------------------------
if __name__ == "__main__":
    key = jax.random.PRNGKey(0)
    keys = jax.random.split(key, 8)

    # Node.params: torch.rand(7) then params[0] filled with 0.
    params = jax.random.uniform(keys[0], (7,), dtype=jnp.float32)
    params = params.at[0].set(0.0)
    w = jnp.array([0.5, -0.3, 1.2], dtype=jnp.float32)

    # Case 1: single node, 3 inlinks, small aligned shape.
    L, B, H = 3, 8, 128
    src = jax.random.normal(keys[1], (L, B, H), dtype=jnp.float32)
    out = jax.block_until_ready(node_forward(src, w, params))
    np.testing.assert_allclose(np.asarray(out),
                               np.asarray(node_forward_ref(src, w, params)),
                               rtol=1e-5, atol=1e-5)

    # Case 2: exercises the tiled (B, H) grid and the >=2-step megacore split.
    B2, H2 = 32, 512
    src2 = jax.random.normal(keys[2], (L, B2, H2), dtype=jnp.float32)
    out2 = jax.block_until_ready(node_forward(src2, w, params))
    np.testing.assert_allclose(np.asarray(out2),
                               np.asarray(node_forward_ref(src2, w, params)),
                               rtol=1e-5, atol=1e-5)

    # Case 3: unaligned (B, H) -> wrapper pads to (8, 128) multiples.
    L3, B3, H3 = 2, 10, 200
    w3 = jnp.array([0.7, 0.2], dtype=jnp.float32)
    src3 = jax.random.normal(keys[3], (L3, B3, H3), dtype=jnp.float32)
    out3 = jax.block_until_ready(node_forward(src3, w3, params))
    assert out3.shape == (B3, H3)
    np.testing.assert_allclose(np.asarray(out3),
                               np.asarray(node_forward_ref(src3, w3, params)),
                               rtol=1e-5, atol=1e-5)

    # Case 4: node with no inlinks (bias-only kernel, no dummy-link HBM read).
    src4 = jnp.zeros((0, B, H), dtype=jnp.float32)
    w4 = jnp.zeros((0,), dtype=jnp.float32)
    out4 = jax.block_until_ready(node_forward(src4, w4, params))
    np.testing.assert_allclose(np.asarray(out4),
                               np.asarray(node_forward_ref(src4, w4, params)),
                               rtol=1e-5, atol=1e-5)

    # Case 5: bf16 HBM storage (in + out); kernel upcasts to f32 in-register.
    src5 = src2.astype(jnp.bfloat16)
    out5 = jax.block_until_ready(
        node_forward(src5, w, params, out_dtype=jnp.bfloat16))
    ref5 = node_forward_ref(src5.astype(jnp.float32), w, params)
    np.testing.assert_allclose(np.asarray(out5.astype(jnp.float32)),
                               np.asarray(ref5), rtol=2e-2, atol=6e-2)

    # Case 6: batched multi-node call (whole graph layer in one pallas_call).
    N, Lb, Bb, Hb = 4, 2, 8, 256
    w_b = jax.random.normal(keys[4], (N, Lb), dtype=jnp.float32)
    p_b = jax.random.uniform(keys[5], (N, 7), dtype=jnp.float32)
    p_b = p_b.at[:, 0].set(0.0)
    src_b = jax.random.normal(keys[6], (N, Lb, Bb, Hb), dtype=jnp.float32)
    out_b = jax.block_until_ready(nodes_forward(src_b, w_b, p_b))
    ref_b = jax.vmap(node_forward_ref)(src_b, w_b, p_b)
    np.testing.assert_allclose(np.asarray(out_b), np.asarray(ref_b),
                               rtol=1e-5, atol=1e-5)

    print("KERNEL_OK")
</pallas_src>

<mosaic_0001>
module attributes {stable_mosaic.version = 11 : i64} {
  func.func @node_kernel(%arg0: i32, %arg1: i32, %arg2: memref<3xf32, #tpu.memory_space<smem>>, %arg3: memref<7xf32, #tpu.memory_space<smem>>, %arg4: memref<3x8x128xf32, #tpu.memory_space<vmem>>, %arg5: memref<8x128xf32, #tpu.memory_space<vmem>>) attributes {dimension_semantics = [#tpu.dimension_semantics<parallel>, #tpu.dimension_semantics<parallel>], iteration_bounds = array<i64: 1, 1>, scalar_prefetch = 0 : i64, scratch_operands = 0 : i64, tpu.core_type = #tpu.core_type<tc>, window_params = [{transform_indices = @transform_0, window_bounds = array<i64: 3>}, {transform_indices = @transform_1, window_bounds = array<i64: 7>}, {transform_indices = @transform_2, window_bounds = array<i64: 3, 8, 128>}, {transform_indices = @transform_3, window_bounds = array<i64: 8, 128>}]} {
    %c0 = arith.constant 0 : index
    %0 = memref.load %arg3[%c0] : memref<7xf32, #tpu.memory_space<smem>>
    %c1 = arith.constant 1 : index
    %1 = memref.load %arg3[%c1] : memref<7xf32, #tpu.memory_space<smem>>
    %c2 = arith.constant 2 : index
    %2 = memref.load %arg3[%c2] : memref<7xf32, #tpu.memory_space<smem>>
    %c3 = arith.constant 3 : index
    %3 = memref.load %arg3[%c3] : memref<7xf32, #tpu.memory_space<smem>>
    %c4 = arith.constant 4 : index
    %4 = memref.load %arg3[%c4] : memref<7xf32, #tpu.memory_space<smem>>
    %c5 = arith.constant 5 : index
    %5 = memref.load %arg3[%c5] : memref<7xf32, #tpu.memory_space<smem>>
    %c0_0 = arith.constant 0 : index
    %c0_1 = arith.constant 0 : index
    %c0_2 = arith.constant 0 : index
    %6 = vector.load %arg4[%c0_0, %c0_1, %c0_2] : memref<3x8x128xf32, #tpu.memory_space<vmem>>, vector<1x8x128xf32>
    %7 = vector.shape_cast %6 : vector<1x8x128xf32> to vector<8x128xf32>
    %c0_3 = arith.constant 0 : index
    %8 = memref.load %arg2[%c0_3] : memref<3xf32, #tpu.memory_space<smem>>
    %9 = vector.broadcast %8 : f32 to vector<8x128xf32>
    %10 = arith.mulf %7, %9 : vector<8x128xf32>
    %11 = vector.broadcast %0 : f32 to vector<8x128xf32>
    %12 = arith.addf %10, %11 : vector<8x128xf32>
    %c1_4 = arith.constant 1 : index
    %c0_5 = arith.constant 0 : index
    %c0_6 = arith.constant 0 : index
    %13 = vector.load %arg4[%c1_4, %c0_5, %c0_6] : memref<3x8x128xf32, #tpu.memory_space<vmem>>, vector<1x8x128xf32>
    %14 = vector.shape_cast %13 : vector<1x8x128xf32> to vector<8x128xf32>
    %c1_7 = arith.constant 1 : index
    %15 = memref.load %arg2[%c1_7] : memref<3xf32, #tpu.memory_space<smem>>
    %16 = vector.broadcast %15 : f32 to vector<8x128xf32>
    %17 = arith.mulf %14, %16 : vector<8x128xf32>
    %18 = arith.addf %12, %17 : vector<8x128xf32>
    %c2_8 = arith.constant 2 : index
    %c0_9 = arith.constant 0 : index
    %c0_10 = arith.constant 0 : index
    %19 = vector.load %arg4[%c2_8, %c0_9, %c0_10] : memref<3x8x128xf32, #tpu.memory_space<vmem>>, vector<1x8x128xf32>
    %20 = vector.shape_cast %19 : vector<1x8x128xf32> to vector<8x128xf32>
    %c2_11 = arith.constant 2 : index
    %21 = memref.load %arg2[%c2_11] : memref<3xf32, #tpu.memory_space<smem>>
    %22 = vector.broadcast %21 : f32 to vector<8x128xf32>
    %23 = arith.mulf %20, %22 : vector<8x128xf32>
    %24 = arith.addf %18, %23 : vector<8x128xf32>
    %25 = math.tanh %24 : vector<8x128xf32>
    %26 = vector.broadcast %1 : f32 to vector<8x128xf32>
    %27 = arith.mulf %26, %25 : vector<8x128xf32>
    %28 = vector.broadcast %2 : f32 to vector<8x128xf32>
    %29 = arith.mulf %28, %24 : vector<8x128xf32>
    %30 = vector.broadcast %3 : f32 to vector<8x128xf32>
    %31 = arith.addf %29, %30 : vector<8x128xf32>
    %32 = math.sin %31 : vector<8x128xf32>
    %33 = arith.mulf %27, %32 : vector<8x128xf32>
    %34 = vector.broadcast %4 : f32 to vector<8x128xf32>
    %35 = arith.mulf %34, %24 : vector<8x128xf32>
    %36 = arith.addf %33, %35 : vector<8x128xf32>
    %37 = vector.broadcast %5 : f32 to vector<8x128xf32>
    %38 = arith.addf %36, %37 : vector<8x128xf32>
    %c0_12 = arith.constant 0 : index
    %c0_13 = arith.constant 0 : index
    %39 = vector.load %arg5[%c0_12, %c0_13] : memref<8x128xf32, #tpu.memory_space<vmem>>, vector<8x128xf32>
    tpu.vector_store %arg5[%c0_12, %c0_13], %38 {strides = array<i32>} : memref<8x128xf32, #tpu.memory_space<vmem>>, vector<8x128xf32>,
    return
  }
  func.func @transform_0(%arg0: i32, %arg1: i32) -> i32 {
    %c0_i32 = arith.constant 0 : i32
    %c0_i32_0 = arith.constant 0 : i32
    return %c0_i32 : i32
  }
  func.func @transform_1(%arg0: i32, %arg1: i32) -> i32 {
    %c0_i32 = arith.constant 0 : i32
    %c0_i32_0 = arith.constant 0 : i32
    return %c0_i32 : i32
  }
  func.func @transform_2(%arg0: i32, %arg1: i32) -> (i32, i32, i32) {
    %c0_i32 = arith.constant 0 : i32
    %c0_i32_0 = arith.constant 0 : i32
    return %c0_i32, %arg0, %arg1 : i32, i32, i32
  }
  func.func @transform_3(%arg0: i32, %arg1: i32) -> (i32, i32) {
    %c0_i32 = arith.constant 0 : i32
    return %arg0, %arg1 : i32, i32
  }
}

</mosaic_0001>

<llo_original>
// kernel: tpu_custom_call.1
$region0: #{tpu_custom_call.1}
  #allocation0 [shape = 'u32[]', space=smem, size = 0x4, offset = 0x4, fixed_abs, tag = 'smem constant byte address 0x4 - core index']
  #allocation1 [shape = 'u32[144,128]{1,0:T(1,128)}', space=vmem, size = 0x12000, scoped, tag = 'internal scratch']
  %s0 = inlined_call_operand.hbm [shape: f32[3], index: 0, kind: input, shape index: {}]
  %s1 = inlined_call_operand.vmem [shape: f32[7], index: 1, kind: input, shape index: {}]
  %s2 = inlined_call_operand.hbm [shape: f32[3,8,128], index: 2, kind: input, shape index: {}]
  %s3 = inlined_call_operand.hbm [shape: f32[8,128], index: 3, kind: output, shape index: {}]
  %s4 = sld [smem:[#allocation0]]
  $region34: #{tpu_custom_call.1} parent=0
    _
  %s6 = ssub.s32 1, %s4
  %s7 = scalar_select 0, %s6, %s4
  $region1: #{tpu_custom_call.1} parent=0
    #allocation2 [shape = 'u8[512]{0}', space=smem, size = 0x200, scoped, tag = 'input window, operand 0, single buffered']
    #allocation3 [shape = 's32[1]{0}', space=sflag, size = 0x4, scoped, tag = 'scoped memory for tpu_custom_call.1']
    #allocation4 [shape = 's32[1]{0}', space=sflag, size = 0x4, scoped, tag = 'scoped memory for tpu_custom_call.1']
    #allocation5 [shape = 's32[1]{0}', space=sflag, size = 0x4, scoped, tag = 'scoped memory for tpu_custom_call.1']
    #allocation6 [shape = 's32[1]{0}', space=sflag, size = 0x4, scoped, tag = 'scoped memory for tpu_custom_call.1']
    #allocation7 [shape = 'u8[512]{0}', space=smem, size = 0x200, scoped, tag = 'input window, operand 1, single buffered']
    #allocation8 [shape = 'u8[12288]{0}', space=vmem, size = 0x3000, scoped, tag = 'input window, operand 2, single buffered']
    #allocation9 [shape = 'u8[4096]{0}', space=vmem, size = 0x1000, scoped, tag = 'output window, operand 0, single buffered']
    %8 = vsyncpa [#allocation5], 0
    %9 = vsyncpa [#allocation6], 0
    %10 = vsyncpa [#allocation3], 0
    %11 = vsyncpa [#allocation4], 0
    // Predicated region
    $region2: #{tpu_custom_call.1} parent=1 // pred_check
      _
    $region3: #{tpu_custom_call.1} parent=1 // pred_check_branch
      %13 = sbr.rel (0) target = $region5
    $region4: #{tpu_custom_call.1} parent=1 // pred_region
      %s15 = ssub.s32 16, 16
      %16 = vsyncadd [#allocation5], %s15
      %19 = dma.hbm_to_smem %s0, 16, [#allocation2], [#allocation5]
    $region5: #{tpu_custom_call.1} parent=1 // pred_fallthru
      _
    // Predicated region
    $region6: #{tpu_custom_call.1} parent=1 // pred_check
      _
    $region7: #{tpu_custom_call.1} parent=1 // pred_check_branch
      %21 = sbr.rel (0) target = $region9
    $region8: #{tpu_custom_call.1} parent=1 // pred_region
      %s23 = ssub.s32 16, 16
      %24 = vsyncadd [#allocation6], %s23
      %s26 = sshll.u32 %s1, 4
      %s27 = int_to_ptr.vmem [resolvable:$true] %s26
      %29 = dma.vmem_to_smem %s27, 16, [#allocation7], [#allocation6]
    $region9: #{tpu_custom_call.1} parent=1 // pred_fallthru
      _
    // Predicated region
    $region10: #{tpu_custom_call.1} parent=1 // pred_check
      _
    $region11: #{tpu_custom_call.1} parent=1 // pred_check_branch
      %31 = sbr.rel (0) target = $region13
    $region12: #{tpu_custom_call.1} parent=1 // pred_region
      %s33 = ssub.s32 384, 384
      %34 = vsyncadd [#allocation3], %s33
      %s35 = sshll.u32 [#allocation8], 4
      %s36 = int_to_ptr.vmem [resolvable:$true] %s35
      %41 = dma.hbm_to_vmem [thread:$0]  %s2, 384, %s36, [#allocation3], 128, 128, 8
    $region13: #{tpu_custom_call.1} parent=1 // pred_fallthru
      _
    // Predicated region
    $region14: #{tpu_custom_call.1} parent=1 // pred_check
      _
    $region15: #{tpu_custom_call.1} parent=1 // pred_check_branch
      %43 = sbr.rel (0) target = $region17
    $region16: #{tpu_custom_call.1} parent=1 // pred_region
      %44 = dma.done [#allocation5], 16
    $region17: #{tpu_custom_call.1} parent=1 // pred_fallthru
      _
    // Predicated region
    $region18: #{tpu_custom_call.1} parent=1 // pred_check
      _
    $region19: #{tpu_custom_call.1} parent=1 // pred_check_branch
      %46 = sbr.rel (0) target = $region21
    $region20: #{tpu_custom_call.1} parent=1 // pred_region
      %47 = dma.done [#allocation6], 16
    $region21: #{tpu_custom_call.1} parent=1 // pred_fallthru
      _
    // Predicated region
    $region22: #{tpu_custom_call.1} parent=1 // pred_check
      _
    $region23: #{tpu_custom_call.1} parent=1 // pred_check_branch
      %49 = sbr.rel (0) target = $region25
    $region24: #{tpu_custom_call.1} parent=1 // pred_region
      %50 = dma.done [#allocation3], 384
    $region25: #{tpu_custom_call.1} parent=1 // pred_fallthru
      _
    %51 = sfence
    %s52 = sld [smem:[#allocation7]]
    %s53 = sld [smem:[#allocation7 + $0x1]]
    %s54 = sld [smem:[#allocation7 + $0x2]]
    %s55 = sld [smem:[#allocation7 + $0x3]]
    %s56 = sld [smem:[#allocation7 + $0x4]]
    %s57 = sld [smem:[#allocation7 + $0x5]]
    %v58 = vld [vmem:[#allocation8] sm:$0xff]
    %s59 = sld [smem:[#allocation2]]
    %v60 = vstv %s59
    %v61 = vmul.f32 %v58, %v60
    %v62 = vstv %s52
    %v63 = vadd.f32 %v61, %v62
    %s64 = scalar_lea.vmem [#allocation8], 8
    %v65 = vld [vmem:[%s64] sm:$0xff]
    %s66 = sld [smem:[#allocation2 + $0x1]]
    %v67 = vstv %s66
    %v68 = vmul.f32 %v65, %v67
    %v69 = vadd.f32 %v63, %v68
    %s70 = scalar_lea.vmem [#allocation8], 16
    %v71 = vld [vmem:[%s70] sm:$0xff]
    %s72 = sld [smem:[#allocation2 + $0x2]]
    %v73 = vstv %s72
    %v74 = vmul.f32 %v71, %v73
    %v75 = vadd.f32 %v69, %v74
    %v76 = vtanh.pop %v75
    %v77 = vstv %s53
    %v78 = vmul.f32 %v77, %v76
    %v79 = vstv %s54
    %v80 = vmul.f32 %v79, %v75
    %v81 = vstv %s55
    %v82 = vadd.f32 %v80, %v81
    %v83 = vand.u32 2147483647, %v82
    %vm84 = vcmp.le.f32.partialorder %v83, 0.7853982
    %vm85 = vcmp.lt.s32.totalorder %v82, 0
    %v86 = vand.u32 %v82, 2139095040
    %v87 = vshrl.u32 %v86, 23
    %v88 = vsub.s32 %v87, 127
    %v89 = vand.u32 2147483647, %v82
    %v90 = vand.u32 %v89, 8388607
    %v91 = vor.u32 %v90, 8388608
    %v92 = vsub.s32 0, %v91
    %v93 = vadd.s32 %v88, 1
    %vm94 = vcmp.gt.s32.totalorder %v93, 0
    %v95 = vsel %vm94, %v93, 0
    %v96 = vshrl.u32 %v95, 5
    %v97 = vand.u32 %v95, 31
    %v98 = vsub.s32 32, %v97
    %v99 = vshrl.u32 683565275, %v98
    %v100 = vshll.u32 683565275, %v97
    %v101 = vshrl.u32 2475754826, %v98
    %v102 = vor.u32 %v100, %v101
    %v103 = vshll.u32 2475754826, %v97
    %v104 = vshrl.u32 2131351028, %v98
    %v105 = vor.u32 %v103, %v104
    %v106 = vshll.u32 2131351028, %v97
    %v107 = vshrl.u32 2102212464, %v98
    %v108 = vor.u32 %v106, %v107
    %v109 = vshll.u32 2102212464, %v97
    %v110 = vshrl.u32 920167782, %v98
    %v111 = vor.u32 %v109, %v110
    %v112 = vshll.u32 920167782, %v97
    %v113 = vshrl.u32 1326507024, %v98
    %v114 = vor.u32 %v112, %v113
    %vm115 = vcmp.lt.s32.totalorder %v96, 1
    %vm116 = vcmp.lt.s32.totalorder %v96, 2
    %vm117 = vcmp.lt.s32.totalorder %v96, 3
    %vm118 = vcmp.lt.s32.totalorder %v96, 4
    %v119 = vsel %vm115, %v99, %v102
    %v120 = vsel %vm118, %v108, 2102212464
    %v121 = vsel %vm117, %v105, %v120
    %v122 = vsel %vm116, %v119, %v121
    %v123 = vsel %vm115, %v102, %v105
    %v124 = vsel %vm118, %v111, 920167782
    %v125 = vsel %vm117, %v108, %v124
    %v126 = vsel %vm116, %v123, %v125
    %v127 = vsel %vm115, %v105, %v108
    %v128 = vsel %vm118, %v114, 1326507024
    %v129 = vsel %vm117, %v111, %v128
    %v130 = vsel %vm116, %v127, %v129
    %v131 = vshll.u32 %v91, 8
    %v132 = vmul.u32.u64.compose %v131, %v130
    %v133 = vextract.low.u32 %v132
    %v134 = vextract.high.u32 %v132
    %v135 = vmul.u32.u64.compose %v131, %v126
    %v136 = vextract.low.u32 %v135
    %v137 = vextract.high.u32 %v135
    %v138 = vmul.u32 %v131, %v122
    %v139 = vadd.s32 %v134, %v136
    %vm140 = vc.u32 %v134, %v136
    %v141 = vadd.s32 %v137, 1
    %v142 = vsel %vm140, %v141, %v137
    %v143 = vadd.s32 %v138, %v142
    %v144 = vadd.s32 %v143, 536870912
    %v145 = vshrl.u32 %v144, 30
    %v146 = vshll.u32 %v145, 30
    %v147 = vsub.s32 %v143, %v146
    %vm148 = vcmp.lt.s32.totalorder %v147, 0
    %v149 = vsub.s32 0, %v147
    %v150 = vsel %vm148, %v149, %v147
    %v151 = vclz %v150
    %v152 = vsub.s32 %v151, 2
    %vm153 = vcmp.gt.s32.totalorder 0, %v152
    %v154 = vsel %vm153, 0, %v152
    %v155 = vsub.s32 32, %v154
    %v156 = vshll.u32 %v147, %v154
    %v157 = vshrl.u32 %v139, %v155
    %v158 = vor.u32 %v156, %v157
    %v159 = vsub.s32 4294967266, %v154
    %v160 = vadd.s32 %v159, 127
    %v161 = vshll.u32 %v160, 23
    %v162 = vor.u32 4788187, %v161
    %v163 = vand.u32 2147483647, %v162
    %v165 = vcvt.s32.f32 %v158
    %v166 = vmul.f32 %v165, %v163
    %v167 = vxor.u32 %v166, 2147483648
    %v168 = vsel %vm85, %v167, %v166
    %v169 = vsub.s32 4, %v145
    %v170 = vsel %vm85, %v169, %v145
    %v171 = vsel %vm84, %v82, %v168
    %v172 = vsel %vm84, 0, %v170
    %v173 = vcosq.f32.pop %v171
    %v174 = vsinq.f32.pop %v171
    %vm175 = vweird.f32 %v82
    %v176 = vadd.s32 %v172, 3
    %v177 = vand.u32 %v176, 3
    %vm178 = vcmp.lt.s32.totalorder %v177, 2
    %vm179 = vcmp.eq.s32.totalorder %v177, 0
    %v180 = vxor.u32 %v174, 2147483648
    %v181 = vsel %vm179, %v173, %v180
    %vm182 = vcmp.eq.s32.totalorder %v177, 2
    %v183 = vxor.u32 %v173, 2147483648
    %v184 = vsel %vm182, %v183, %v174
    %v185 = vsel %vm178, %v181, %v184
    %v186 = vsel %vm175, nan, %v185
    %v187 = vmul.f32 %v78, %v186
    %v188 = vstv %s56
    %v189 = vmul.f32 %v188, %v75
    %v190 = vadd.f32 %v187, %v189
    %v191 = vstv %s57
    %v192 = vadd.f32 %v190, %v191
    %193 = vst [vmem:[#allocation9] sm:$0xff] %v192
    // Predicated region
    $region26: #{tpu_custom_call.1} parent=1 // pred_check
      _
    $region27: #{tpu_custom_call.1} parent=1 // pred_check_branch
      %195 = sbr.rel (0) target = $region29
    $region28: #{tpu_custom_call.1} parent=1 // pred_region
      %s197 = ssub.s32 128, 128
      %198 = vsyncadd [#allocation4], %s197
      %s200 = sshll.u32 [#allocation9], 4
      %s201 = int_to_ptr.vmem [resolvable:$true] %s200
      %203 = dma.vmem_to_hbm [thread:$0]  %s201, 128, %s3, [#allocation4]
    $region29: #{tpu_custom_call.1} parent=1 // pred_fallthru
      _
    // Predicated region
    $region30: #{tpu_custom_call.1} parent=1 // pred_check
      _
    $region31: #{tpu_custom_call.1} parent=1 // pred_check_branch
      %205 = sbr.rel (0) target = $region33
    $region32: #{tpu_custom_call.1} parent=1 // pred_region
      %206 = dma.done [#allocation4], 128
    $region33: #{tpu_custom_call.1} parent=1 // pred_fallthru
      _
    %207 = vsyncpa [#allocation3], 1
    %208 = vsyncpa [#allocation4], 1
    %209 = vsyncpa [#allocation5], 1
    %210 = vsyncpa [#allocation6], 1

</llo_original>
